<compile_context>
chip_gen: v5e
topology: v5e:2x2
jax: 0.10.0
libtpu: 0.0.40
codegen_flags: <defaults>
</compile_context>

<pallas_src>
import jax
import jax.numpy as jnp
from jax.experimental import pallas as pl
from jax.experimental.pallas import tpu as pltpu

_EPS = 1e-5  # nn.BatchNorm2d default eps


def _make_kernel(N, H, W, Cout):
    NH = N * H
    L = W * Cout
    inv_n = 1.0 / float(N * H * W)

    def kernel(slab1_ref, w1_ref, w2_ref, t_ref, p_ref, out_ref, slab2_ref):
        # p_ref rows: 0=gamma1, 1=beta1, 2=gamma2, 3=beta2, 4=residual bias.

        def batchnorm(v, g, b):
            # Per-lane sum / sum-of-squares, then ONE channel-selection matmul
            # (T[l,l'] = 1 iff same channel) reduces over W and broadcasts the
            # per-channel stats back to every (w, c) lane.  All f32.
            s = jnp.sum(v, axis=0, keepdims=True)              # (1, L)
            sq = jnp.sum(v * v, axis=0, keepdims=True)         # (1, L)
            st = jnp.concatenate([s, sq], axis=0)              # (2, L)
            m = jnp.dot(st, t_ref[...],
                        preferred_element_type=jnp.float32) * inv_n
            mean = m[0:1, :]
            var = jnp.maximum(m[1:2, :] - mean * mean, 0.0)
            return (v - mean) * jax.lax.rsqrt(var + _EPS) * g + b

        # Fused conv1 + residual: bf16 MXU inputs, f32 accumulation.
        # Output columns [0:L] = conv1 pre-BN, [L:2L] = residual path.
        y = jnp.dot(slab1_ref[...], w1_ref[...],
                    preferred_element_type=jnp.float32)         # (NH, 2L)
        res = y[:, L:2 * L] + p_ref[4:5, :]
        # bn1 + relu   (conv bias b1 dropped: cancelled by BN mean subtract)
        h = jnp.maximum(batchnorm(y[:, 0:L], p_ref[0:1, :], p_ref[1:2, :]), 0.0)

        # Build conv2's im2row slab once in VMEM scratch (bf16, lane-aligned
        # 128-wide column blocks).  W-padding is folded into the banded
        # weights; H-padding is the zero boundary rows of the shifted blocks.
        hb3 = h.astype(jnp.bfloat16).reshape(N, H, L)
        z = jnp.zeros((N, 1, L), jnp.bfloat16)
        up = jnp.concatenate([z, hb3[:, :H - 1, :]], axis=1).reshape(NH, L)
        dn = jnp.concatenate([hb3[:, 1:, :], z], axis=1).reshape(NH, L)
        slab2_ref[:, 0:L] = up                     # dy = 0 (reads row y-1)
        slab2_ref[:, L:2 * L] = hb3.reshape(NH, L)  # dy = 1
        slab2_ref[:, 2 * L:3 * L] = dn             # dy = 2 (reads row y+1)

        # Fused conv2 (K = 3L) -> bn2
        y2 = jnp.dot(slab2_ref[...], w2_ref[...],
                     preferred_element_type=jnp.float32)        # (NH, L)
        y2 = batchnorm(y2, p_ref[2:3, :], p_ref[3:4, :])

        out_ref[...] = jnp.maximum(y2 + res, 0.0)

    return kernel


def _make_band(w_t, cin, cout, W):
    """Banded conv weights with dy stacked along the contraction dim.

    w_t: (3, 3, cin, cout).  Returns (3*W*cin, W*cout) with
      band[dy*W*cin + x_in*cin + ci, x_out*cout + co] = w_t[dy, dx, ci, co]
    where x_in = x_out + dx - 1 (taps reading W-padding are simply absent).
    """
    bands = []
    for dy in range(3):
        b = jnp.zeros((W * cin, W * cout), jnp.float32)
        for dx in range(3):
            shift = jnp.eye(W, k=1 - dx, dtype=jnp.float32)
            b = b + jnp.kron(shift, w_t[dy, dx])
        bands.append(b)
    return jnp.concatenate(bands, axis=0)


def residual_block_pallas(x_nchw, params):
    N, Cin, H, W = x_nchw.shape
    Cout = params["w1"].shape[0]
    use_adjust = (Cin != Cout)
    Lin = W * Cin
    L = W * Cout
    NH = N * H

    # NCHW -> lane-dense rows (N, H, W*Cin); pad H by 1 (W handled by bands).
    x_rows = jnp.transpose(x_nchw, (0, 2, 3, 1)).reshape(N, H, Lin)
    xpad = jnp.pad(x_rows.astype(jnp.float32), ((0, 0), (1, 1), (0, 0)))
    # conv1 im2row slab (dy-major blocks along K), built once in the wrapper.
    slab1 = jnp.concatenate(
        [xpad[:, 0:H], xpad[:, 1:H + 1], xpad[:, 2:H + 2]],
        axis=-1).reshape(NH, 3 * Lin).astype(jnp.bfloat16)

    # torch conv weights (Cout, Cin, kh, kw) -> (kh, kw, Cin, Cout) -> bands.
    w1_t = jnp.transpose(params["w1"], (2, 3, 1, 0)).astype(jnp.float32)
    w2_t = jnp.transpose(params["w2"], (2, 3, 1, 0)).astype(jnp.float32)
    band1 = _make_band(w1_t, Cin, Cout, W)          # (3*Lin, L)
    band2 = _make_band(w2_t, Cout, Cout, W)         # (3*L,  L)

    # Residual folded into conv1's weight as extra output columns, driven only
    # by the dy=1 (center-row) rows of the slab.
    if use_adjust:
        wr_t = params["wr"][:, :, 0, 0].T.astype(jnp.float32)    # (Cin, Cout)
        r_mat = jnp.kron(jnp.eye(W, dtype=jnp.float32), wr_t)    # (Lin, L)
        br = jnp.tile(params["br"].astype(jnp.float32), W)       # (L,)
    else:
        r_mat = jnp.eye(Lin, dtype=jnp.float32)                  # identity path
        br = jnp.zeros((L,), jnp.float32)
    res_cols = jnp.concatenate(
        [jnp.zeros((Lin, L), jnp.float32), r_mat,
         jnp.zeros((Lin, L), jnp.float32)], axis=0)              # (3*Lin, L)
    w1big = jnp.concatenate([band1, res_cols], axis=1).astype(jnp.bfloat16)
    w2big = band2.astype(jnp.bfloat16)

    # Channel-selection matrix for lane-dense BN statistics (f32, exact 0/1).
    t_mat = jnp.kron(jnp.ones((W, W), jnp.float32),
                     jnp.eye(Cout, dtype=jnp.float32))           # (L, L)

    # Coalesced per-channel parameter slab: one (8, L) DMA instead of five.
    tile_c = lambda v: jnp.tile(v.astype(jnp.float32), W)        # (L,)
    zrow = jnp.zeros((L,), jnp.float32)
    pvec = jnp.stack([tile_c(params["g1"]), tile_c(params["be1"]),
                      tile_c(params["g2"]), tile_c(params["be2"]),
                      br, zrow, zrow, zrow])                     # (8, L)

    kernel = _make_kernel(N, H, W, Cout)
    vmem = pl.BlockSpec(memory_space=pltpu.MemorySpace.VMEM)

    out2d = pl.pallas_call(
        kernel,
        out_shape=jax.ShapeDtypeStruct((NH, L), jnp.float32),    # lane-dense
        in_specs=[vmem] * 5,
        out_specs=vmem,
        scratch_shapes=[pltpu.VMEM((NH, 3 * L), jnp.bfloat16)],  # conv2 slab
    )(slab1, w1big, w2big, t_mat, pvec)

    return jnp.transpose(out2d.reshape(N, H, W, Cout), (0, 3, 1, 2))  # NCHW


# ---------------- pure-JAX f32 reference (for verification) ----------------
def _bn_ref(y, g, b):
    mean = jnp.mean(y, axis=(0, 2, 3), keepdims=True)
    var = jnp.mean((y - mean) ** 2, axis=(0, 2, 3), keepdims=True)
    return (y - mean) * jax.lax.rsqrt(var + _EPS) * g[None, :, None, None] \
        + b[None, :, None, None]


def residual_block_ref(x, p):
    dn = ("NCHW", "OIHW", "NCHW")
    y = jax.lax.conv_general_dilated(x, p["w1"], (1, 1), ((1, 1), (1, 1)),
                                     dimension_numbers=dn)
    y = y + p["b1"][None, :, None, None]
    y = jnp.maximum(_bn_ref(y, p["g1"], p["be1"]), 0.0)
    y = jax.lax.conv_general_dilated(y, p["w2"], (1, 1), ((1, 1), (1, 1)),
                                     dimension_numbers=dn)
    y = y + p["b2"][None, :, None, None]
    y = _bn_ref(y, p["g2"], p["be2"])
    if x.shape[1] != y.shape[1]:
        res = jax.lax.conv_general_dilated(x, p["wr"], (1, 1), ((0, 0), (0, 0)),
                                           dimension_numbers=dn)
        res = res + p["br"][None, :, None, None]
    else:
        res = x
    return jnp.maximum(y + res, 0.0)


def _make_params(key, cin, cout):
    ks = jax.random.split(key, 10)
    return {
        "w1": jax.random.normal(ks[0], (cout, cin, 3, 3), jnp.float32) * 0.1,
        "b1": jax.random.normal(ks[1], (cout,), jnp.float32) * 0.1,
        "w2": jax.random.normal(ks[2], (cout, cout, 3, 3), jnp.float32) * 0.1,
        "b2": jax.random.normal(ks[3], (cout,), jnp.float32) * 0.1,
        "wr": jax.random.normal(ks[4], (cout, cin, 1, 1), jnp.float32) * 0.1,
        "br": jax.random.normal(ks[5], (cout,), jnp.float32) * 0.1,
        "g1": 1.0 + 0.1 * jax.random.normal(ks[6], (cout,), jnp.float32),
        "be1": 0.1 * jax.random.normal(ks[7], (cout,), jnp.float32),
        "g2": 1.0 + 0.1 * jax.random.normal(ks[8], (cout,), jnp.float32),
        "be2": 0.1 * jax.random.normal(ks[9], (cout,), jnp.float32),
    }


if __name__ == "__main__":
    key = jax.random.PRNGKey(0)
    k_p1, k_x1, k_p2, k_x2 = jax.random.split(key, 4)

    # Tolerance vs. the f32 reference is relaxed because MXU operands are
    # cast to bf16 (accumulation and all BN math stay in f32).
    ATOL = RTOL = 5e-2

    # Case 1: Cin != Cout -> 1x1-conv residual path (fused into conv1).
    N, Cin, Cout, H, W = 2, 4, 8, 16, 16
    params1 = _make_params(k_p1, Cin, Cout)
    x1 = jax.random.normal(k_x1, (N, Cin, H, W), jnp.float32)
    out1 = jax.block_until_ready(residual_block_pallas(x1, params1))
    ref1 = residual_block_ref(x1, params1)
    assert out1.shape == (N, Cout, H, W)
    assert jnp.allclose(out1, ref1, atol=ATOL, rtol=RTOL), \
        f"case1 max abs diff = {jnp.max(jnp.abs(out1 - ref1))}"

    # Case 2: Cin == Cout -> identity residual path.
    params2 = _make_params(k_p2, Cout, Cout)
    x2 = jax.random.normal(k_x2, (N, Cout, H, W), jnp.float32)
    out2 = jax.block_until_ready(residual_block_pallas(x2, params2))
    ref2 = residual_block_ref(x2, params2)
    assert out2.shape == (N, Cout, H, W)
    assert jnp.allclose(out2, ref2, atol=ATOL, rtol=RTOL), \
        f"case2 max abs diff = {jnp.max(jnp.abs(out2 - ref2))}"

    print("KERNEL_OK")
</pallas_src>

<mosaic_0001>
module attributes {stable_mosaic.version = 11 : i64} {
  func.func @kernel(%arg0: memref<32x192xbf16, #tpu.memory_space<vmem>>, %arg1: memref<192x256xbf16, #tpu.memory_space<vmem>>, %arg2: memref<384x128xbf16, #tpu.memory_space<vmem>>, %arg3: memref<128x128xf32, #tpu.memory_space<vmem>>, %arg4: memref<8x128xf32, #tpu.memory_space<vmem>>, %arg5: memref<32x128xf32, #tpu.memory_space<vmem>>, %arg6: memref<32x384xbf16, #tpu.memory_space<vmem>>) attributes {dimension_semantics = [], scalar_prefetch = 0 : i64, scratch_operands = 1 : i64, tpu.core_type = #tpu.core_type<tc>} {
    %c0 = arith.constant 0 : index
    %c0_0 = arith.constant 0 : index
    %0 = vector.load %arg0[%c0, %c0_0] : memref<32x192xbf16, #tpu.memory_space<vmem>>, vector<32x192xbf16>
    %c0_1 = arith.constant 0 : index
    %c0_2 = arith.constant 0 : index
    %1 = vector.load %arg1[%c0_1, %c0_2] : memref<192x256xbf16, #tpu.memory_space<vmem>>, vector<192x256xbf16>
    %cst = arith.constant dense<0.000000e+00> : vector<32x256xf32>
    %2 = tpu.matmul %0, %1, %cst {dimension_numbers = #tpu.dot_dimension_numbers<[1], [0], [0], [1], [0, 0, 1, 1], [], []>} : vector<32x192xbf16>, vector<192x256xbf16>, vector<32x256xf32> -> vector<32x256xf32>
    %3 = vector.extract_strided_slice %2 {offsets = [0, 128], sizes = [32, 128], strides = [1, 1]} : vector<32x256xf32> to vector<32x128xf32>
    %c4 = arith.constant 4 : index
    %c0_3 = arith.constant 0 : index
    %4 = vector.load %arg4[%c4, %c0_3] : memref<8x128xf32, #tpu.memory_space<vmem>>, vector<1x128xf32>
    %5 = vector.broadcast %4 : vector<1x128xf32> to vector<32x128xf32>
    %6 = arith.addf %3, %5 : vector<32x128xf32>
    %7 = vector.extract_strided_slice %2 {offsets = [0, 0], sizes = [32, 128], strides = [1, 1]} : vector<32x256xf32> to vector<32x128xf32>
    %c0_4 = arith.constant 0 : index
    %c0_5 = arith.constant 0 : index
    %8 = vector.load %arg4[%c0_4, %c0_5] : memref<8x128xf32, #tpu.memory_space<vmem>>, vector<1x128xf32>
    %c1 = arith.constant 1 : index
    %c0_6 = arith.constant 0 : index
    %9 = vector.load %arg4[%c1, %c0_6] : memref<8x128xf32, #tpu.memory_space<vmem>>, vector<1x128xf32>
    %cst_7 = arith.constant dense<0.000000e+00> : vector<128xf32>
    %10 = vector.multi_reduction <add>, %7, %cst_7 [0] : vector<32x128xf32> to vector<128xf32>
    %11 = vector.shape_cast %10 : vector<128xf32> to vector<1x128xf32>
    %12 = arith.mulf %7, %7 : vector<32x128xf32>
    %cst_8 = arith.constant dense<0.000000e+00> : vector<128xf32>
    %13 = vector.multi_reduction <add>, %12, %cst_8 [0] : vector<32x128xf32> to vector<128xf32>
    %14 = vector.shape_cast %13 : vector<128xf32> to vector<1x128xf32>
    %15 = tpu.concatenate %11, %14 in 0 : vector<1x128xf32>, vector<1x128xf32> -> vector<2x128xf32>
    %c0_9 = arith.constant 0 : index
    %c0_10 = arith.constant 0 : index
    %16 = vector.load %arg3[%c0_9, %c0_10] : memref<128x128xf32, #tpu.memory_space<vmem>>, vector<128x128xf32>
    %cst_11 = arith.constant dense<0.000000e+00> : vector<2x128xf32>
    %17 = tpu.matmul %15, %16, %cst_11 {dimension_numbers = #tpu.dot_dimension_numbers<[1], [0], [0], [1], [0, 0, 1, 1], [], []>} : vector<2x128xf32>, vector<128x128xf32>, vector<2x128xf32> -> vector<2x128xf32>
    %cst_12 = arith.constant 0.001953125 : f32
    %18 = vector.broadcast %cst_12 : f32 to vector<2x128xf32>
    %19 = arith.mulf %17, %18 : vector<2x128xf32>
    %20 = vector.extract_strided_slice %19 {offsets = [0, 0], sizes = [1, 128], strides = [1, 1]} : vector<2x128xf32> to vector<1x128xf32>
    %21 = vector.extract_strided_slice %19 {offsets = [1, 0], sizes = [1, 128], strides = [1, 1]} : vector<2x128xf32> to vector<1x128xf32>
    %22 = arith.mulf %20, %20 : vector<1x128xf32>
    %23 = arith.subf %21, %22 : vector<1x128xf32>
    %cst_13 = arith.constant 0.000000e+00 : f32
    %24 = vector.broadcast %cst_13 : f32 to vector<1x128xf32>
    %25 = arith.maximumf %23, %24 : vector<1x128xf32>
    %26 = vector.broadcast %20 : vector<1x128xf32> to vector<32x128xf32>
    %27 = arith.subf %7, %26 : vector<32x128xf32>
    %cst_14 = arith.constant 9.99999974E-6 : f32
    %28 = vector.broadcast %cst_14 : f32 to vector<1x128xf32>
    %29 = arith.addf %25, %28 : vector<1x128xf32>
    %30 = math.rsqrt %29 : vector<1x128xf32>
    %31 = vector.broadcast %30 : vector<1x128xf32> to vector<32x128xf32>
    %32 = arith.mulf %27, %31 : vector<32x128xf32>
    %33 = vector.broadcast %8 : vector<1x128xf32> to vector<32x128xf32>
    %34 = arith.mulf %32, %33 : vector<32x128xf32>
    %35 = vector.broadcast %9 : vector<1x128xf32> to vector<32x128xf32>
    %36 = arith.addf %34, %35 : vector<32x128xf32>
    %cst_15 = arith.constant 0.000000e+00 : f32
    %37 = vector.broadcast %cst_15 : f32 to vector<32x128xf32>
    %38 = arith.maximumf %36, %37 : vector<32x128xf32>
    %39 = arith.truncf %38 : vector<32x128xf32> to vector<32x128xbf16>
    %40 = vector.shape_cast %39 : vector<32x128xbf16> to vector<2x16x128xbf16>
    %cst_16 = arith.constant 0.000000e+00 : bf16
    %41 = vector.broadcast %cst_16 : bf16 to vector<2x1x128xbf16>
    %42 = vector.extract_strided_slice %40 {offsets = [0, 0, 0], sizes = [2, 15, 128], strides = [1, 1, 1]} : vector<2x16x128xbf16> to vector<2x15x128xbf16>
    %43 = tpu.concatenate %41, %42 in 1 : vector<2x1x128xbf16>, vector<2x15x128xbf16> -> vector<2x16x128xbf16>
    %44 = vector.shape_cast %43 : vector<2x16x128xbf16> to vector<32x128xbf16>
    %45 = vector.extract_strided_slice %40 {offsets = [0, 1, 0], sizes = [2, 15, 128], strides = [1, 1, 1]} : vector<2x16x128xbf16> to vector<2x15x128xbf16>
    %46 = tpu.concatenate %45, %41 in 1 : vector<2x15x128xbf16>, vector<2x1x128xbf16> -> vector<2x16x128xbf16>
    %47 = vector.shape_cast %46 : vector<2x16x128xbf16> to vector<32x128xbf16>
    %c0_17 = arith.constant 0 : index
    %c0_18 = arith.constant 0 : index
    %48 = vector.load %arg6[%c0_17, %c0_18] : memref<32x384xbf16, #tpu.memory_space<vmem>>, vector<32x128xbf16>
    tpu.vector_store %arg6[%c0_17, %c0_18], %44 {strides = array<i32>} : memref<32x384xbf16, #tpu.memory_space<vmem>>, vector<32x128xbf16>,
    %49 = vector.shape_cast %40 : vector<2x16x128xbf16> to vector<32x128xbf16>
    %c0_19 = arith.constant 0 : index
    %c128 = arith.constant 128 : index
    %50 = vector.load %arg6[%c0_19, %c128] : memref<32x384xbf16, #tpu.memory_space<vmem>>, vector<32x128xbf16>
    tpu.vector_store %arg6[%c0_19, %c128], %49 {strides = array<i32>} : memref<32x384xbf16, #tpu.memory_space<vmem>>, vector<32x128xbf16>,
    %c0_20 = arith.constant 0 : index
    %c256 = arith.constant 256 : index
    %51 = vector.load %arg6[%c0_20, %c256] : memref<32x384xbf16, #tpu.memory_space<vmem>>, vector<32x128xbf16>
    tpu.vector_store %arg6[%c0_20, %c256], %47 {strides = array<i32>} : memref<32x384xbf16, #tpu.memory_space<vmem>>, vector<32x128xbf16>,
    %c0_21 = arith.constant 0 : index
    %c0_22 = arith.constant 0 : index
    %52 = vector.load %arg6[%c0_21, %c0_22] : memref<32x384xbf16, #tpu.memory_space<vmem>>, vector<32x384xbf16>
    %c0_23 = arith.constant 0 : index
    %c0_24 = arith.constant 0 : index
    %53 = vector.load %arg2[%c0_23, %c0_24] : memref<384x128xbf16, #tpu.memory_space<vmem>>, vector<384x128xbf16>
    %cst_25 = arith.constant dense<0.000000e+00> : vector<32x128xf32>
    %54 = tpu.matmul %52, %53, %cst_25 {dimension_numbers = #tpu.dot_dimension_numbers<[1], [0], [0], [1], [0, 0, 1, 1], [], []>} : vector<32x384xbf16>, vector<384x128xbf16>, vector<32x128xf32> -> vector<32x128xf32>
    %c2 = arith.constant 2 : index
    %c0_26 = arith.constant 0 : index
    %55 = vector.load %arg4[%c2, %c0_26] : memref<8x128xf32, #tpu.memory_space<vmem>>, vector<1x128xf32>
    %c3 = arith.constant 3 : index
    %c0_27 = arith.constant 0 : index
    %56 = vector.load %arg4[%c3, %c0_27] : memref<8x128xf32, #tpu.memory_space<vmem>>, vector<1x128xf32>
    %cst_28 = arith.constant dense<0.000000e+00> : vector<128xf32>
    %57 = vector.multi_reduction <add>, %54, %cst_28 [0] : vector<32x128xf32> to vector<128xf32>
    %58 = vector.shape_cast %57 : vector<128xf32> to vector<1x128xf32>
    %59 = arith.mulf %54, %54 : vector<32x128xf32>
    %cst_29 = arith.constant dense<0.000000e+00> : vector<128xf32>
    %60 = vector.multi_reduction <add>, %59, %cst_29 [0] : vector<32x128xf32> to vector<128xf32>
    %61 = vector.shape_cast %60 : vector<128xf32> to vector<1x128xf32>
    %62 = tpu.concatenate %58, %61 in 0 : vector<1x128xf32>, vector<1x128xf32> -> vector<2x128xf32>
    %c0_30 = arith.constant 0 : index
    %c0_31 = arith.constant 0 : index
    %63 = vector.load %arg3[%c0_30, %c0_31] : memref<128x128xf32, #tpu.memory_space<vmem>>, vector<128x128xf32>
    %cst_32 = arith.constant dense<0.000000e+00> : vector<2x128xf32>
    %64 = tpu.matmul %62, %63, %cst_32 {dimension_numbers = #tpu.dot_dimension_numbers<[1], [0], [0], [1], [0, 0, 1, 1], [], []>} : vector<2x128xf32>, vector<128x128xf32>, vector<2x128xf32> -> vector<2x128xf32>
    %cst_33 = arith.constant 0.001953125 : f32
    %65 = vector.broadcast %cst_33 : f32 to vector<2x128xf32>
    %66 = arith.mulf %64, %65 : vector<2x128xf32>
    %67 = vector.extract_strided_slice %66 {offsets = [0, 0], sizes = [1, 128], strides = [1, 1]} : vector<2x128xf32> to vector<1x128xf32>
    %68 = vector.extract_strided_slice %66 {offsets = [1, 0], sizes = [1, 128], strides = [1, 1]} : vector<2x128xf32> to vector<1x128xf32>
    %69 = arith.mulf %67, %67 : vector<1x128xf32>
    %70 = arith.subf %68, %69 : vector<1x128xf32>
    %cst_34 = arith.constant 0.000000e+00 : f32
    %71 = vector.broadcast %cst_34 : f32 to vector<1x128xf32>
    %72 = arith.maximumf %70, %71 : vector<1x128xf32>
    %73 = vector.broadcast %67 : vector<1x128xf32> to vector<32x128xf32>
    %74 = arith.subf %54, %73 : vector<32x128xf32>
    %cst_35 = arith.constant 9.99999974E-6 : f32
    %75 = vector.broadcast %cst_35 : f32 to vector<1x128xf32>
    %76 = arith.addf %72, %75 : vector<1x128xf32>
    %77 = math.rsqrt %76 : vector<1x128xf32>
    %78 = vector.broadcast %77 : vector<1x128xf32> to vector<32x128xf32>
    %79 = arith.mulf %74, %78 : vector<32x128xf32>
    %80 = vector.broadcast %55 : vector<1x128xf32> to vector<32x128xf32>
    %81 = arith.mulf %79, %80 : vector<32x128xf32>
    %82 = vector.broadcast %56 : vector<1x128xf32> to vector<32x128xf32>
    %83 = arith.addf %81, %82 : vector<32x128xf32>
    %84 = arith.addf %83, %6 : vector<32x128xf32>
    %cst_36 = arith.constant 0.000000e+00 : f32
    %85 = vector.broadcast %cst_36 : f32 to vector<32x128xf32>
    %86 = arith.maximumf %84, %85 : vector<32x128xf32>
    %c0_37 = arith.constant 0 : index
    %c0_38 = arith.constant 0 : index
    %87 = vector.load %arg5[%c0_37, %c0_38] : memref<32x128xf32, #tpu.memory_space<vmem>>, vector<32x128xf32>
    tpu.vector_store %arg5[%c0_37, %c0_38], %86 {strides = array<i32>} : memref<32x128xf32, #tpu.memory_space<vmem>>, vector<32x128xf32>,
    return
  }
}

</mosaic_0001>

<llo_original>
// kernel: tpu_custom_call.1
$region0: #{tpu_custom_call.1}
  #allocation0 [shape = 'u32[]', space=smem, size = 0x4, offset = 0x4, fixed_abs, tag = 'smem constant byte address 0x4 - core index']
  #allocation1 [shape = 'u32[72,128]{1,0:T(1,128)}', space=vmem, size = 0x9000, scoped, tag = 'internal scratch']
  #allocation2 [shape = 'bf16[32,384]{1,0:T(8,128)(2,1)}', space=vmem, size = 0x6000, scoped, tag = 'scratch operand']
  %s0 = inlined_call_operand.hbm [shape: bf16[32,192], index: 0, kind: input, shape index: {}]
  %s1 = inlined_call_operand.hbm [shape: bf16[192,256], index: 1, kind: input, shape index: {}]
  %s2 = inlined_call_operand.hbm [shape: bf16[384,128], index: 2, kind: input, shape index: {}]
  %s3 = inlined_call_operand.hbm [shape: f32[128,128], index: 3, kind: input, shape index: {}]
  %s4 = inlined_call_operand.hbm [shape: f32[8,128], index: 4, kind: input, shape index: {}]
  %s5 = inlined_call_operand.hbm [shape: f32[32,128], index: 5, kind: output, shape index: {}]
  %s6 = sld [smem:[#allocation0]]
  $region50: #{tpu_custom_call.1} parent=0
    _
  %s8 = ssub.s32 1, %s6
  %s9 = scalar_select 0, %s8, %s6
  $region1: #{tpu_custom_call.1} parent=0
    #allocation3 [shape = 'u8[16384]{0}', space=vmem, size = 0x4000, scoped, tag = 'input window, operand 0, single buffered']
    #allocation4 [shape = 's32[1]{0}', space=sflag, size = 0x4, scoped, tag = 'scoped memory for tpu_custom_call.1']
    #allocation5 [shape = 's32[1]{0}', space=sflag, size = 0x4, scoped, tag = 'scoped memory for tpu_custom_call.1']
    #allocation6 [shape = 'u8[98304]{0}', space=vmem, size = 0x18000, scoped, tag = 'input window, operand 1, single buffered']
    #allocation7 [shape = 's32[1]{0}', space=sflag, size = 0x4, scoped, tag = 'scoped memory for tpu_custom_call.1']
    #allocation8 [shape = 'u8[98304]{0}', space=vmem, size = 0x18000, scoped, tag = 'input window, operand 2, single buffered']
    #allocation9 [shape = 'u8[65536]{0}', space=vmem, size = 0x10000, scoped, tag = 'input window, operand 3, single buffered']
    #allocation10 [shape = 's32[1]{0}', space=sflag, size = 0x4, scoped, tag = 'scoped memory for tpu_custom_call.1']
    #allocation11 [shape = 'u8[4096]{0}', space=vmem, size = 0x1000, scoped, tag = 'input window, operand 4, single buffered']
    #allocation12 [shape = 'u8[16384]{0}', space=vmem, size = 0x4000, scoped, tag = 'output window, operand 0, single buffered']
    %10 = vsyncpa [#allocation4], 0
    %11 = vsyncpa [#allocation7], 0
    %12 = vsyncpa [#allocation10], 0
    %13 = vsyncpa [#allocation5], 0
    // Predicated region
    $region2: #{tpu_custom_call.1} parent=1 // pred_check
      _
    $region3: #{tpu_custom_call.1} parent=1 // pred_check_branch
      %15 = sbr.rel (0) target = $region5
    $region4: #{tpu_custom_call.1} parent=1 // pred_region
      %17 = vsyncadd [#allocation4], 0
      %s18 = sshll.u32 %s0, 4
      %s19 = int_to_ptr.hbm [resolvable:$true] %s18
      %s20 = sshll.u32 [#allocation3], 4
      %s21 = int_to_ptr.vmem [resolvable:$true] %s20
      %26 = dma.hbm_to_vmem [thread:$0]  %s19, 512, %s21, [#allocation4], 128, 128, 8
    $region5: #{tpu_custom_call.1} parent=1 // pred_fallthru
      _
    // Predicated region
    $region6: #{tpu_custom_call.1} parent=1 // pred_check
      _
    $region7: #{tpu_custom_call.1} parent=1 // pred_check_branch
      %28 = sbr.rel (0) target = $region9
    $region8: #{tpu_custom_call.1} parent=1 // pred_region
      %30 = vsyncadd [#allocation7], 0
      %s31 = sshll.u32 %s1, 4
      %s32 = int_to_ptr.hbm [resolvable:$true] %s31
      %s33 = sshll.u32 [#allocation6], 4
      %s34 = int_to_ptr.vmem [resolvable:$true] %s33
      %39 = dma.hbm_to_vmem [thread:$0]  %s32, 3072, %s34, [#allocation7], 128, 128, 8
    $region9: #{tpu_custom_call.1} parent=1 // pred_fallthru
      _
    // Predicated region
    $region10: #{tpu_custom_call.1} parent=1 // pred_check
      _
    $region11: #{tpu_custom_call.1} parent=1 // pred_check_branch
      %41 = sbr.rel (0) target = $region13
    $region12: #{tpu_custom_call.1} parent=1 // pred_region
      %43 = vsyncadd [#allocation7], 0
      %s44 = sshll.u32 %s2, 4
      %s45 = int_to_ptr.hbm [resolvable:$true] %s44
      %s46 = sshll.u32 [#allocation8], 4
      %s47 = int_to_ptr.vmem [resolvable:$true] %s46
      %52 = dma.hbm_to_vmem [thread:$0]  %s45, 3072, %s47, [#allocation7], 64, 64, 4
    $region13: #{tpu_custom_call.1} parent=1 // pred_fallthru
      _
    // Predicated region
    $region14: #{tpu_custom_call.1} parent=1 // pred_check
      _
    $region15: #{tpu_custom_call.1} parent=1 // pred_check_branch
      %54 = sbr.rel (0) target = $region17
    $region16: #{tpu_custom_call.1} parent=1 // pred_region
      %56 = vsyncadd [#allocation10], 0
      %s57 = sshll.u32 %s3, 4
      %s58 = int_to_ptr.hbm [resolvable:$true] %s57
      %s59 = sshll.u32 [#allocation9], 4
      %s60 = int_to_ptr.vmem [resolvable:$true] %s59
      %65 = dma.hbm_to_vmem [thread:$0]  %s58, 2048, %s60, [#allocation10], 128, 128, 8
    $region17: #{tpu_custom_call.1} parent=1 // pred_fallthru
      _
    // Predicated region
    $region18: #{tpu_custom_call.1} parent=1 // pred_check
      _
    $region19: #{tpu_custom_call.1} parent=1 // pred_check_branch
      %67 = sbr.rel (0) target = $region21
    $region20: #{tpu_custom_call.1} parent=1 // pred_region
      %69 = vsyncadd [#allocation10], 0
      %s71 = sshll.u32 %s4, 4
      %s72 = int_to_ptr.hbm [resolvable:$true] %s71
      %s73 = sshll.u32 [#allocation11], 4
      %s74 = int_to_ptr.vmem [resolvable:$true] %s73
      %76 = dma.hbm_to_vmem [thread:$0]  %s72, 128, %s74, [#allocation10]
    $region21: #{tpu_custom_call.1} parent=1 // pred_fallthru
      _
    // Predicated region
    $region22: #{tpu_custom_call.1} parent=1 // pred_check
      _
    $region23: #{tpu_custom_call.1} parent=1 // pred_check_branch
      %78 = sbr.rel (0) target = $region25
    $region24: #{tpu_custom_call.1} parent=1 // pred_region
      %80 = dma.done [#allocation4], 512
    $region25: #{tpu_custom_call.1} parent=1 // pred_fallthru
      _
    // Predicated region
    $region26: #{tpu_custom_call.1} parent=1 // pred_check
      _
    $region27: #{tpu_custom_call.1} parent=1 // pred_check_branch
      %82 = sbr.rel (0) target = $region29
    $region28: #{tpu_custom_call.1} parent=1 // pred_region
      %84 = dma.done [#allocation7], 3072
    $region29: #{tpu_custom_call.1} parent=1 // pred_fallthru
      _
    // Predicated region
    $region30: #{tpu_custom_call.1} parent=1 // pred_check
      _
    $region31: #{tpu_custom_call.1} parent=1 // pred_check_branch
      %86 = sbr.rel (0) target = $region33
    $region32: #{tpu_custom_call.1} parent=1 // pred_region
      %88 = dma.done [#allocation7], 3072
    $region33: #{tpu_custom_call.1} parent=1 // pred_fallthru
      _
    // Predicated region
    $region34: #{tpu_custom_call.1} parent=1 // pred_check
      _
    $region35: #{tpu_custom_call.1} parent=1 // pred_check_branch
      %90 = sbr.rel (0) target = $region37
    $region36: #{tpu_custom_call.1} parent=1 // pred_region
      %92 = dma.done [#allocation10], 2048
    $region37: #{tpu_custom_call.1} parent=1 // pred_fallthru
      _
    // Predicated region
    $region38: #{tpu_custom_call.1} parent=1 // pred_check
      _
    $region39: #{tpu_custom_call.1} parent=1 // pred_check_branch
      %94 = sbr.rel (0) target = $region41
    $region40: #{tpu_custom_call.1} parent=1 // pred_region
      %96 = dma.done [#allocation10], 128
    $region41: #{tpu_custom_call.1} parent=1 // pred_fallthru
      _
    %v98 = vld [vmem:[#allocation3] sm:$0xff]
    %v99 = vld [vmem:[#allocation3 + $0x8] sm:$0xff]
    %v100 = vld [vmem:[#allocation3 + $0x10] sm:$0xff]
    %v101 = vld [vmem:[#allocation3 + $0x18] sm:$0xff]
    %v102 = vld [vmem:[#allocation6] sm:$0xff]
    %v103 = vld [vmem:[#allocation6 + $0x8] sm:$0xff]
    %v104 = vld [vmem:[#allocation6 + $0x10] sm:$0xff]
    %v105 = vld [vmem:[#allocation6 + $0x18] sm:$0xff]
    %v106 = vld [vmem:[#allocation6 + $0x20] sm:$0xff]
    %v107 = vld [vmem:[#allocation6 + $0x28] sm:$0xff]
    %v108 = vld [vmem:[#allocation6 + $0x30] sm:$0xff]
    %v109 = vld [vmem:[#allocation6 + $0x38] sm:$0xff]
    %v110 = vld [vmem:[#allocation6 + $0x40] sm:$0xff]
    %v111 = vld [vmem:[#allocation6 + $0x48] sm:$0xff]
    %v112 = vld [vmem:[#allocation6 + $0x50] sm:$0xff]
    %v113 = vld [vmem:[#allocation6 + $0x58] sm:$0xff]
    %v114 = vld [vmem:[#allocation6 + $0x60] sm:$0xff]
    %v115 = vld [vmem:[#allocation6 + $0x68] sm:$0xff]
    %v116 = vld [vmem:[#allocation6 + $0x70] sm:$0xff]
    %v117 = vld [vmem:[#allocation6 + $0x78] sm:$0xff]
    %v118 = vld [vmem:[#allocation6 + $0x80] sm:$0xff]
    %v119 = vld [vmem:[#allocation6 + $0x88] sm:$0xff]
    %v120 = vld [vmem:[#allocation6 + $0x90] sm:$0xff]
    %v121 = vld [vmem:[#allocation6 + $0x98] sm:$0xff]
    %v122 = vld [vmem:[#allocation6 + $0xa0] sm:$0xff]
    %v123 = vld [vmem:[#allocation6 + $0xa8] sm:$0xff]
    %v124 = vld [vmem:[#allocation6 + $0xb0] sm:$0xff]
    %v125 = vld [vmem:[#allocation6 + $0xb8] sm:$0xff]
    %v130 = vunpack.c.l.b16 %v98
    %v131 = vunpack.c.h.b16 %v98
    %v132 = vunpack.c.l.b16 %v99
    %v133 = vunpack.c.h.b16 %v99
    %v134 = vunpack.c.l.b16 %v100
    %v135 = vunpack.c.h.b16 %v100
    %v136 = vunpack.c.l.b16 %v101
    %v137 = vunpack.c.h.b16 %v101
    %v138 = vpack.c.b16 %v132, %v130
    %v139 = vpack.c.b16 %v133, %v131
    %v140 = vpack.c.b16 %v136, %v134
    %v141 = vpack.c.b16 %v137, %v135
    %v168 = vunpack.c.l.b16 %v102
    %v169 = vunpack.c.h.b16 %v102
    %v170 = vunpack.c.l.b16 %v103
    %v171 = vunpack.c.h.b16 %v103
    %v172 = vunpack.c.l.b16 %v104
    %v173 = vunpack.c.h.b16 %v104
    %v174 = vunpack.c.l.b16 %v105
    %v175 = vunpack.c.h.b16 %v105
    %v176 = vunpack.c.l.b16 %v106
    %v177 = vunpack.c.h.b16 %v106
    %v178 = vunpack.c.l.b16 %v107
    %v179 = vunpack.c.h.b16 %v107
    %v180 = vunpack.c.l.b16 %v108
    %v181 = vunpack.c.h.b16 %v108
    %v182 = vunpack.c.l.b16 %v109
    %v183 = vunpack.c.h.b16 %v109
    %v184 = vunpack.c.l.b16 %v110
    %v185 = vunpack.c.h.b16 %v110
    %v186 = vunpack.c.l.b16 %v111
    %v187 = vunpack.c.h.b16 %v111
    %v188 = vunpack.c.l.b16 %v112
    %v189 = vunpack.c.h.b16 %v112
    %v190 = vunpack.c.l.b16 %v113
    %v191 = vunpack.c.h.b16 %v113
    %v192 = vunpack.c.l.b16 %v114
    %v193 = vunpack.c.h.b16 %v114
    %v194 = vunpack.c.l.b16 %v115
    %v195 = vunpack.c.h.b16 %v115
    %v196 = vunpack.c.l.b16 %v116
    %v197 = vunpack.c.h.b16 %v116
    %v198 = vunpack.c.l.b16 %v117
    %v199 = vunpack.c.h.b16 %v117
    %v200 = vunpack.c.l.b16 %v118
    %v201 = vunpack.c.h.b16 %v118
    %v202 = vunpack.c.l.b16 %v119
    %v203 = vunpack.c.h.b16 %v119
    %v204 = vunpack.c.l.b16 %v120
    %v205 = vunpack.c.h.b16 %v120
    %v206 = vunpack.c.l.b16 %v121
    %v207 = vunpack.c.h.b16 %v121
    %v208 = vunpack.c.l.b16 %v122
    %v209 = vunpack.c.h.b16 %v122
    %v210 = vunpack.c.l.b16 %v123
    %v211 = vunpack.c.h.b16 %v123
    %v212 = vunpack.c.l.b16 %v124
    %v213 = vunpack.c.h.b16 %v124
    %v214 = vunpack.c.l.b16 %v125
    %v215 = vunpack.c.h.b16 %v125
    %v216 = vpack.c.b16 %v170, %v168
    %v217 = vpack.c.b16 %v171, %v169
    %v218 = vpack.c.b16 %v174, %v172
    %v219 = vpack.c.b16 %v175, %v173
    %v220 = vpack.c.b16 %v178, %v176
    %v221 = vpack.c.b16 %v179, %v177
    %v222 = vpack.c.b16 %v182, %v180
    %v223 = vpack.c.b16 %v183, %v181
    %v224 = vpack.c.b16 %v186, %v184
    %v225 = vpack.c.b16 %v187, %v185
    %v226 = vpack.c.b16 %v190, %v188
    %v227 = vpack.c.b16 %v191, %v189
    %v228 = vpack.c.b16 %v194, %v192
    %v229 = vpack.c.b16 %v195, %v193
    %v230 = vpack.c.b16 %v198, %v196
    %v231 = vpack.c.b16 %v199, %v197
    %v232 = vpack.c.b16 %v202, %v200
    %v233 = vpack.c.b16 %v203, %v201
    %v234 = vpack.c.b16 %v206, %v204
    %v235 = vpack.c.b16 %v207, %v205
    %v236 = vpack.c.b16 %v210, %v208
    %v237 = vpack.c.b16 %v211, %v209
    %v238 = vpack.c.b16 %v214, %v212
    %v239 = vpack.c.b16 %v215, %v213
    %vm264 = vcmask 523264
    %v266 = vsel %vm264, %v139, 0
    %v269 = vsel %vm264, %v141, 0
    %271 = vmatpush.bf16.msra.mxu0 %v230
    %272 = vmatpush.bf16.msra.mxu0 %v228
    %273 = vmatpush.bf16.msra.mxu0 %v226
    %274 = vmatpush.bf16.msra.mxu0 %v224
    %275 = vmatpush.bf16.msra.mxu0 %v222
    %276 = vmatpush.bf16.msra.mxu0 %v220
    %277 = vmatpush.bf16.msra.mxu0 %v218
    %278 = vmatpush.bf16.msra.mxu0 %v216
    %279 = vmatmul.bf16.gmra.mxu0 %v138
    %v280 = vpop.f32.mrf.mxu0
    %v281 = vadd.f32 0.0, %v280
    %v282 = vpop.f32.mrf.mxu0
    %v283 = vadd.f32 0.0, %v282
    %284 = vmatmul.bf16.gmra.mxu0 %v140
    %v285 = vpop.f32.mrf.mxu0
    %v286 = vadd.f32 0.0, %v285
    %v287 = vpop.f32.mrf.mxu0
    %v288 = vadd.f32 0.0, %v287
    %289 = vdwg.mxu0
    %290 = vmatpush.bf16.msra.mxu0 0
    %291 = vmatpush.bf16.msra.mxu0 0
    %292 = vmatpush.bf16.msra.mxu0 0
    %293 = vmatpush.bf16.msra.mxu0 0
    %294 = vmatpush.bf16.msra.mxu0 %v238
    %295 = vmatpush.bf16.msra.mxu0 %v236
    %296 = vmatpush.bf16.msra.mxu0 %v234
    %297 = vmatpush.bf16.msra.mxu0 %v232
    %298 = vmatmul.bf16.gmra.mxu0 %v266
    %v299 = vpop.f32.mrf.mxu0
    %v300 = vadd.f32 %v281, %v299
    %v301 = vpop.f32.mrf.mxu0
    %v302 = vadd.f32 %v283, %v301
    %303 = vmatmul.bf16.gmra.mxu0 %v269
    %v304 = vpop.f32.mrf.mxu0
    %v305 = vadd.f32 %v286, %v304
    %v306 = vpop.f32.mrf.mxu0
    %v307 = vadd.f32 %v288, %v306
    %308 = vdwg.mxu0
    %309 = vmatpush.bf16.msra.mxu0 %v231
    %310 = vmatpush.bf16.msra.mxu0 %v229
    %311 = vmatpush.bf16.msra.mxu0 %v227
    %312 = vmatpush.bf16.msra.mxu0 %v225
    %313 = vmatpush.bf16.msra.mxu0 %v223
    %314 = vmatpush.bf16.msra.mxu0 %v221
    %315 = vmatpush.bf16.msra.mxu0 %v219
    %316 = vmatpush.bf16.msra.mxu0 %v217
    %317 = vmatmul.bf16.gmra.mxu0 %v138
    %v318 = vpop.f32.mrf.mxu0
    %v319 = vadd.f32 0.0, %v318
    %v320 = vpop.f32.mrf.mxu0
    %v321 = vadd.f32 0.0, %v320
    %322 = vmatmul.bf16.gmra.mxu0 %v140
    %v323 = vpop.f32.mrf.mxu0
    %v324 = vadd.f32 0.0, %v323
    %v325 = vpop.f32.mrf.mxu0
    %v326 = vadd.f32 0.0, %v325
    %327 = vdwg.mxu0
    %328 = vmatpush.bf16.msra.mxu0 0
    %329 = vmatpush.bf16.msra.mxu0 0
    %330 = vmatpush.bf16.msra.mxu0 0
    %331 = vmatpush.bf16.msra.mxu0 0
    %332 = vmatpush.bf16.msra.mxu0 %v239
    %333 = vmatpush.bf16.msra.mxu0 %v237
    %334 = vmatpush.bf16.msra.mxu0 %v235
    %335 = vmatpush.bf16.msra.mxu0 %v233
    %336 = vmatmul.bf16.gmra.mxu0 %v266
    %v337 = vpop.f32.mrf.mxu0
    %v338 = vadd.f32 %v319, %v337
    %v339 = vpop.f32.mrf.mxu0
    %v340 = vadd.f32 %v321, %v339
    %341 = vmatmul.bf16.gmra.mxu0 %v269
    %v342 = vpop.f32.mrf.mxu0
    %v343 = vadd.f32 %v324, %v342
    %v344 = vpop.f32.mrf.mxu0
    %v345 = vadd.f32 %v326, %v344
    %346 = vdwg.mxu0
    %v347 = vld [vmem:[#allocation11 + $0x4] sm:$0x1]
    %v348 = vperm.slane %v347, 0
    %v349 = vadd.f32 %v338, %v348
    %v350 = vadd.f32 %v340, %v348
    %v351 = vadd.f32 %v343, %v348
    %v352 = vadd.f32 %v345, %v348
    %v353 = vld [vmem:[#allocation11] sm:$0x1]
    %v354 = vld [vmem:[#allocation11 + $0x1] sm:$0x1]
    %v355 = vadd.f32 %v300, %v302
    %v356 = vadd.f32 %v355, %v305
    %v357 = vadd.f32 %v356, %v307
    %v358 = vrot.slane %v357, 4
    %v359 = vadd.f32 %v357, %v358
    %v360 = vrot.slane %v359, 2
    %v361 = vadd.f32 %v359, %v360
    %v362 = vrot.slane %v361, 1
    %v363 = vadd.f32 %v361, %v362
    %v364 = vmul.f32 %v300, %v300
    %v365 = vmul.f32 %v302, %v302
    %v366 = vmul.f32 %v305, %v305
    %v367 = vmul.f32 %v307, %v307
    %v368 = vadd.f32 %v364, %v365
    %v369 = vadd.f32 %v368, %v366
    %v370 = vadd.f32 %v369, %v367
    %v371 = vrot.slane %v370, 4
    %v372 = vadd.f32 %v370, %v371
    %v373 = vrot.slane %v372, 2
    %v374 = vadd.f32 %v372, %v373
    %v375 = vrot.slane %v374, 1
    %v376 = vadd.f32 %v374, %v375
    %vm377 = vcmask 1040384
    %v378 = vsel %vm377, %v363, %v376
    %v379 = vld [vmem:[#allocation9] sm:$0xff]
    %v380 = vld [vmem:[#allocation9 + $0x8] sm:$0xff]
    %v381 = vld [vmem:[#allocation9 + $0x10] sm:$0xff]
    %v382 = vld [vmem:[#allocation9 + $0x18] sm:$0xff]
    %v383 = vld [vmem:[#allocation9 + $0x20] sm:$0xff]
    %v384 = vld [vmem:[#allocation9 + $0x28] sm:$0xff]
    %v385 = vld [vmem:[#allocation9 + $0x30] sm:$0xff]
    %v386 = vld [vmem:[#allocation9 + $0x38] sm:$0xff]
    %v387 = vld [vmem:[#allocation9 + $0x40] sm:$0xff]
    %v388 = vld [vmem:[#allocation9 + $0x48] sm:$0xff]
    %v389 = vld [vmem:[#allocation9 + $0x50] sm:$0xff]
    %v390 = vld [vmem:[#allocation9 + $0x58] sm:$0xff]
    %v391 = vld [vmem:[#allocation9 + $0x60] sm:$0xff]
    %v392 = vld [vmem:[#allocation9 + $0x68] sm:$0xff]
    %v393 = vld [vmem:[#allocation9 + $0x70] sm:$0xff]
    %v394 = vld [vmem:[#allocation9 + $0x78] sm:$0xff]
    %395 = vmatpush.msra.mxu0 %v394
    %396 = vmatpush.msra.mxu0 %v393
    %397 = vmatpush.msra.mxu0 %v392
    %398 = vmatpush.msra.mxu0 %v391
    %399 = vmatpush.msra.mxu0 %v390
    %400 = vmatpush.msra.mxu0 %v389
    %401 = vmatpush.msra.mxu0 %v388
    %402 = vmatpush.msra.mxu0 %v387
    %403 = vmatpush.msra.mxu0 %v386
    %404 = vmatpush.msra.mxu0 %v385
    %405 = vmatpush.msra.mxu0 %v384
    %406 = vmatpush.msra.mxu0 %v383
    %407 = vmatpush.msra.mxu0 %v382
    %408 = vmatpush.msra.mxu0 %v381
    %409 = vmatpush.msra.mxu0 %v380
    %410 = vmatpush.msra.mxu0 %v379
    %411 = vmatmul.f32.gmra.mxu0 %v378
    %v412 = vpop.f32.mrf.mxu0
    %v413 = vadd.f32 0.0, %v412
    %414 = vdwg.mxu0
    %v415 = vmul.f32 %v413, 0.001953125
    %v416 = vmul.f32 %v415, %v415
    %v418 = vrot.slane %v416, 7
    %v420 = vsub.f32 %v415, %v418
    %v421 = vmax.f32 %v420, 0.0
    %v422 = vperm.slane %v415, 0
    %v423 = vsub.f32 %v300, %v422
    %v424 = vsub.f32 %v302, %v422
    %v425 = vsub.f32 %v305, %v422
    %v426 = vsub.f32 %v307, %v422
    %v427 = vadd.f32 %v421, 1e-05
    %v428 = vrsqrt.pop %v427
    %v429 = vmul.f32 %v428, %v427
    %v430 = vmul.f32 %v429, %v428
    %v431 = vmul.f32 0.5, %v430
    %v432 = vsub.f32 1.5, %v431
    %v433 = vmul.f32 %v428, %v432
    %vm434 = vweird.f32 %v427
    %vm435 = vweird.f32 %v428
    %vm436 = vmor %vm434, %vm435
    %v437 = vsel %vm436, %v428, %v433
    %v438 = vperm.slane %v437, 1
    %v439 = vmul.f32 %v423, %v438
    %v440 = vmul.f32 %v424, %v438
    %v441 = vmul.f32 %v425, %v438
    %v442 = vmul.f32 %v426, %v438
    %v443 = vperm.slane %v353, 0
    %v444 = vmul.f32 %v439, %v443
    %v445 = vmul.f32 %v440, %v443
    %v446 = vmul.f32 %v441, %v443
    %v447 = vmul.f32 %v442, %v443
    %v448 = vperm.slane %v354, 0
    %v449 = vadd.f32 %v444, %v448
    %v450 = vadd.f32 %v445, %v448
    %v451 = vadd.f32 %v446, %v448
    %v452 = vadd.f32 %v447, %v448
    %v453 = vmax.f32 %v449, 0.0
    %v454 = vmax.f32 %v450, 0.0
    %v455 = vmax.f32 %v451, 0.0
    %v456 = vmax.f32 %v452, 0.0
    %v457 = vpack.c.bf16 %v453, %v453
    %v458 = vpack.c.bf16 %v454, %v454
    %v459 = vpack.c.bf16 %v455, %v455
    %v460 = vpack.c.bf16 %v456, %v456
    %v465 = vunpack.c.l.b16 %v457
    %v466 = vunpack.c.l.b16 %v458
    %v467 = vunpack.c.l.b16 %v459
    %v468 = vunpack.c.l.b16 %v460
    %v469 = vpack.c.b16 %v466, %v465
    %v470 = vpack.c.b16 %v468, %v467
    %v472 = vshrl.u32 %v469, 16
    %v474 = vrot.slane %v472, 7
    %v475 = vshll.u32 %v469, 16
    %v477 = vor.u32 %v474, %v475
    %v479 = vshrl.u32 %v470, 16
    %v481 = vrot.slane %v479, 7
    %v482 = vshll.u32 %v470, 16
    %v484 = vor.u32 %v481, %v482
    %vm487 = vcmask 1040384
    %vm488 = vsmask.f32 256
    %vm489 = vmand %vm487, %vm488
    %v490 = vsel %vm489, 0, %v477
    %v491 = vsel %vm489, 0, %v484
    %v492 = vrot.slane %v475, 1
    %v493 = vor.u32 %v472, %v492
    %v494 = vrot.slane %v482, 1
    %v495 = vor.u32 %v479, %v494
    %vm498 = vcmask 1047552
    %vm499 = vsmask.f32 7424
    %vm500 = vmand %vm498, %vm499
    %v501 = vsel %vm500, %v493, 0
    %v502 = vsel %vm500, %v495, 0
    %v505 = vunpack.c.l.b16 %v490
    %v506 = vunpack.c.h.b16 %v490
    %v507 = vunpack.c.l.b16 %v491
    %v508 = vunpack.c.h.b16 %v491
    %v509 = vpack.c.b16 %v505, %v505
    %v510 = vpack.c.b16 %v506, %v506
    %v511 = vpack.c.b16 %v507, %v507
    %v512 = vpack.c.b16 %v508, %v508
    %517 = vst [vmem:[#allocation2] sm:$0xf] %v509
    %518 = vst [vmem:[#allocation2 + $0xc] sm:$0xf] %v510
    %519 = vst [vmem:[#allocation2 + $0x18] sm:$0xf] %v511
    %520 = vst [vmem:[#allocation2 + $0x24] sm:$0xf] %v512
    %521 = vst [vmem:[#allocation2 + $0x4] sm:$0xf] %v457
    %522 = vst [vmem:[#allocation2 + $0x10] sm:$0xf] %v458
    %523 = vst [vmem:[#allocation2 + $0x1c] sm:$0xf] %v459
    %524 = vst [vmem:[#allocation2 + $0x28] sm:$0xf] %v460
    %v527 = vunpack.c.l.b16 %v501
    %v528 = vunpack.c.h.b16 %v501
    %v529 = vunpack.c.l.b16 %v502
    %v530 = vunpack.c.h.b16 %v502
    %v531 = vpack.c.b16 %v527, %v527
    %v532 = vpack.c.b16 %v528, %v528
    %v533 = vpack.c.b16 %v529, %v529
    %v534 = vpack.c.b16 %v530, %v530
    %539 = vst [vmem:[#allocation2 + $0x8] sm:$0xf] %v531
    %540 = vst [vmem:[#allocation2 + $0x14] sm:$0xf] %v532
    %541 = vst [vmem:[#allocation2 + $0x20] sm:$0xf] %v533
    %542 = vst [vmem:[#allocation2 + $0x2c] sm:$0xf] %v534
    %v543 = vld [vmem:[#allocation2] sm:$0xff]
    %v544 = vld [vmem:[#allocation2 + $0x8] sm:$0xf]
    %v545 = vld [vmem:[#allocation2 + $0xc] sm:$0xff]
    %v546 = vld [vmem:[#allocation2 + $0x14] sm:$0xf]
    %v547 = vld [vmem:[#allocation2 + $0x18] sm:$0xff]
    %v548 = vld [vmem:[#allocation2 + $0x20] sm:$0xf]
    %v549 = vld [vmem:[#allocation2 + $0x24] sm:$0xff]
    %v550 = vld [vmem:[#allocation2 + $0x2c] sm:$0xf]
    %v551 = vld [vmem:[#allocation8] sm:$0xf]
    %v552 = vld [vmem:[#allocation8 + $0x4] sm:$0xf]
    %v553 = vld [vmem:[#allocation8 + $0x8] sm:$0xf]
    %v554 = vld [vmem:[#allocation8 + $0xc] sm:$0xf]
    %v555 = vld [vmem:[#allocation8 + $0x10] sm:$0xf]
    %v556 = vld [vmem:[#allocation8 + $0x14] sm:$0xf]
    %v557 = vld [vmem:[#allocation8 + $0x18] sm:$0xf]
    %v558 = vld [vmem:[#allocation8 + $0x1c] sm:$0xf]
    %v559 = vld [vmem:[#allocation8 + $0x20] sm:$0xf]
    %v560 = vld [vmem:[#allocation8 + $0x24] sm:$0xf]
    %v561 = vld [vmem:[#allocation8 + $0x28] sm:$0xf]
    %v562 = vld [vmem:[#allocation8 + $0x2c] sm:$0xf]
    %v563 = vld [vmem:[#allocation8 + $0x30] sm:$0xf]
    %v564 = vld [vmem:[#allocation8 + $0x34] sm:$0xf]
    %v565 = vld [vmem:[#allocation8 + $0x38] sm:$0xf]
    %v566 = vld [vmem:[#allocation8 + $0x3c] sm:$0xf]
    %v567 = vld [vmem:[#allocation8 + $0x40] sm:$0xf]
    %v568 = vld [vmem:[#allocation8 + $0x44] sm:$0xf]
    %v569 = vld [vmem:[#allocation8 + $0x48] sm:$0xf]
    %v570 = vld [vmem:[#allocation8 + $0x4c] sm:$0xf]
    %v571 = vld [vmem:[#allocation8 + $0x50] sm:$0xf]
    %v572 = vld [vmem:[#allocation8 + $0x54] sm:$0xf]
    %v573 = vld [vmem:[#allocation8 + $0x58] sm:$0xf]
    %v574 = vld [vmem:[#allocation8 + $0x5c] sm:$0xf]
    %v575 = vld [vmem:[#allocation8 + $0x60] sm:$0xf]
    %v576 = vld [vmem:[#allocation8 + $0x64] sm:$0xf]
    %v577 = vld [vmem:[#allocation8 + $0x68] sm:$0xf]
    %v578 = vld [vmem:[#allocation8 + $0x6c] sm:$0xf]
    %v579 = vld [vmem:[#allocation8 + $0x70] sm:$0xf]
    %v580 = vld [vmem:[#allocation8 + $0x74] sm:$0xf]
    %v581 = vld [vmem:[#allocation8 + $0x78] sm:$0xf]
    %v582 = vld [vmem:[#allocation8 + $0x7c] sm:$0xf]
    %v583 = vld [vmem:[#allocation8 + $0x80] sm:$0xf]
    %v584 = vld [vmem:[#allocation8 + $0x84] sm:$0xf]
    %v585 = vld [vmem:[#allocation8 + $0x88] sm:$0xf]
    %v586 = vld [vmem:[#allocation8 + $0x8c] sm:$0xf]
    %v587 = vld [vmem:[#allocation8 + $0x90] sm:$0xf]
    %v588 = vld [vmem:[#allocation8 + $0x94] sm:$0xf]
    %v589 = vld [vmem:[#allocation8 + $0x98] sm:$0xf]
    %v590 = vld [vmem:[#allocation8 + $0x9c] sm:$0xf]
    %v591 = vld [vmem:[#allocation8 + $0xa0] sm:$0xf]
    %v592 = vld [vmem:[#allocation8 + $0xa4] sm:$0xf]
    %v593 = vld [vmem:[#allocation8 + $0xa8] sm:$0xf]
    %v594 = vld [vmem:[#allocation8 + $0xac] sm:$0xf]
    %v595 = vld [vmem:[#allocation8 + $0xb0] sm:$0xf]
    %v596 = vld [vmem:[#allocation8 + $0xb4] sm:$0xf]
    %v597 = vld [vmem:[#allocation8 + $0xb8] sm:$0xf]
    %v598 = vld [vmem:[#allocation8 + $0xbc] sm:$0xf]
    %v607 = vunpack.c.l.b16 %v543
    %v608 = vunpack.c.h.b16 %v543
    %v609 = vunpack.c.l.b16 %v544
    %v610 = vunpack.c.l.b16 %v545
    %v611 = vunpack.c.h.b16 %v545
    %v612 = vunpack.c.l.b16 %v546
    %v613 = vunpack.c.l.b16 %v547
    %v614 = vunpack.c.h.b16 %v547
    %v615 = vunpack.c.l.b16 %v548
    %v616 = vunpack.c.l.b16 %v549
    %v617 = vunpack.c.h.b16 %v549
    %v618 = vunpack.c.l.b16 %v550
    %v619 = vpack.c.b16 %v610, %v607
    %v620 = vpack.c.b16 %v611, %v608
    %v621 = vpack.c.b16 %v612, %v609
    %v622 = vpack.c.b16 %v616, %v613
    %v623 = vpack.c.b16 %v617, %v614
    %v624 = vpack.c.b16 %v618, %v615
    %v679 = vunpack.c.l.b16 %v551
    %v680 = vunpack.c.l.b16 %v552
    %v681 = vunpack.c.l.b16 %v553
    %v682 = vunpack.c.l.b16 %v554
    %v683 = vunpack.c.l.b16 %v555
    %v684 = vunpack.c.l.b16 %v556
    %v685 = vunpack.c.l.b16 %v557
    %v686 = vunpack.c.l.b16 %v558
    %v687 = vunpack.c.l.b16 %v559
    %v688 = vunpack.c.l.b16 %v560
    %v689 = vunpack.c.l.b16 %v561
    %v690 = vunpack.c.l.b16 %v562
    %v691 = vunpack.c.l.b16 %v563
    %v692 = vunpack.c.l.b16 %v564
    %v693 = vunpack.c.l.b16 %v565
    %v694 = vunpack.c.l.b16 %v566
    %v695 = vunpack.c.l.b16 %v567
    %v696 = vunpack.c.l.b16 %v568
    %v697 = vunpack.c.l.b16 %v569
    %v698 = vunpack.c.l.b16 %v570
    %v699 = vunpack.c.l.b16 %v571
    %v700 = vunpack.c.l.b16 %v572
    %v701 = vunpack.c.l.b16 %v573
    %v702 = vunpack.c.l.b16 %v574
    %v703 = vunpack.c.l.b16 %v575
    %v704 = vunpack.c.l.b16 %v576
    %v705 = vunpack.c.l.b16 %v577
    %v706 = vunpack.c.l.b16 %v578
    %v707 = vunpack.c.l.b16 %v579
    %v708 = vunpack.c.l.b16 %v580
    %v709 = vunpack.c.l.b16 %v581
    %v710 = vunpack.c.l.b16 %v582
    %v711 = vunpack.c.l.b16 %v583
    %v712 = vunpack.c.l.b16 %v584
    %v713 = vunpack.c.l.b16 %v585
    %v714 = vunpack.c.l.b16 %v586
    %v715 = vunpack.c.l.b16 %v587
    %v716 = vunpack.c.l.b16 %v588
    %v717 = vunpack.c.l.b16 %v589
    %v718 = vunpack.c.l.b16 %v590
    %v719 = vunpack.c.l.b16 %v591
    %v720 = vunpack.c.l.b16 %v592
    %v721 = vunpack.c.l.b16 %v593
    %v722 = vunpack.c.l.b16 %v594
    %v723 = vunpack.c.l.b16 %v595
    %v724 = vunpack.c.l.b16 %v596
    %v725 = vunpack.c.l.b16 %v597
    %v726 = vunpack.c.l.b16 %v598
    %v727 = vpack.c.b16 %v680, %v679
    %v728 = vpack.c.b16 %v682, %v681
    %v729 = vpack.c.b16 %v684, %v683
    %v730 = vpack.c.b16 %v686, %v685
    %v731 = vpack.c.b16 %v688, %v687
    %v732 = vpack.c.b16 %v690, %v689
    %v733 = vpack.c.b16 %v692, %v691
    %v734 = vpack.c.b16 %v694, %v693
    %v735 = vpack.c.b16 %v696, %v695
    %v736 = vpack.c.b16 %v698, %v697
    %v737 = vpack.c.b16 %v700, %v699
    %v738 = vpack.c.b16 %v702, %v701
    %v739 = vpack.c.b16 %v704, %v703
    %v740 = vpack.c.b16 %v706, %v705
    %v741 = vpack.c.b16 %v708, %v707
    %v742 = vpack.c.b16 %v710, %v709
    %v743 = vpack.c.b16 %v712, %v711
    %v744 = vpack.c.b16 %v714, %v713
    %v745 = vpack.c.b16 %v716, %v715
    %v746 = vpack.c.b16 %v718, %v717
    %v747 = vpack.c.b16 %v720, %v719
    %v748 = vpack.c.b16 %v722, %v721
    %v749 = vpack.c.b16 %v724, %v723
    %v750 = vpack.c.b16 %v726, %v725
    %775 = vmatpush.bf16.msra.mxu0 %v734
    %776 = vmatpush.bf16.msra.mxu0 %v733
    %777 = vmatpush.bf16.msra.mxu0 %v732
    %778 = vmatpush.bf16.msra.mxu0 %v731
    %779 = vmatpush.bf16.msra.mxu0 %v730
    %780 = vmatpush.bf16.msra.mxu0 %v729
    %781 = vmatpush.bf16.msra.mxu0 %v728
    %782 = vmatpush.bf16.msra.mxu0 %v727
    %783 = vmatmul.bf16.gmra.mxu0 %v619
    %v784 = vpop.f32.mrf.mxu0
    %v785 = vadd.f32 0.0, %v784
    %v786 = vpop.f32.mrf.mxu0
    %v787 = vadd.f32 0.0, %v786
    %788 = vmatmul.bf16.gmra.mxu0 %v622
    %v789 = vpop.f32.mrf.mxu0
    %v790 = vadd.f32 0.0, %v789
    %v791 = vpop.f32.mrf.mxu0
    %v792 = vadd.f32 0.0, %v791
    %793 = vdwg.mxu0
    %794 = vmatpush.bf16.msra.mxu0 %v742
    %795 = vmatpush.bf16.msra.mxu0 %v741
    %796 = vmatpush.bf16.msra.mxu0 %v740
    %797 = vmatpush.bf16.msra.mxu0 %v739
    %798 = vmatpush.bf16.msra.mxu0 %v738
    %799 = vmatpush.bf16.msra.mxu0 %v737
    %800 = vmatpush.bf16.msra.mxu0 %v736
    %801 = vmatpush.bf16.msra.mxu0 %v735
    %802 = vmatmul.bf16.gmra.mxu0 %v620
    %v803 = vpop.f32.mrf.mxu0
    %v804 = vadd.f32 %v785, %v803
    %v805 = vpop.f32.mrf.mxu0
    %v806 = vadd.f32 %v787, %v805
    %807 = vmatmul.bf16.gmra.mxu0 %v623
    %v808 = vpop.f32.mrf.mxu0
    %v809 = vadd.f32 %v790, %v808
    %v810 = vpop.f32.mrf.mxu0
    %v811 = vadd.f32 %v792, %v810
    %812 = vdwg.mxu0
    %813 = vmatpush.bf16.msra.mxu0 %v750
    %814 = vmatpush.bf16.msra.mxu0 %v749
    %815 = vmatpush.bf16.msra.mxu0 %v748
    %816 = vmatpush.bf16.msra.mxu0 %v747
    %817 = vmatpush.bf16.msra.mxu0 %v746
    %818 = vmatpush.bf16.msra.mxu0 %v745
    %819 = vmatpush.bf16.msra.mxu0 %v744
    %820 = vmatpush.bf16.msra.mxu0 %v743
    %821 = vmatmul.bf16.gmra.mxu0 %v621
    %v822 = vpop.f32.mrf.mxu0
    %v823 = vadd.f32 %v804, %v822
    %v824 = vpop.f32.mrf.mxu0
    %v825 = vadd.f32 %v806, %v824
    %826 = vmatmul.bf16.gmra.mxu0 %v624
    %v827 = vpop.f32.mrf.mxu0
    %v828 = vadd.f32 %v809, %v827
    %v829 = vpop.f32.mrf.mxu0
    %v830 = vadd.f32 %v811, %v829
    %831 = vdwg.mxu0
    %v832 = vld [vmem:[#allocation11 + $0x2] sm:$0x1]
    %v833 = vld [vmem:[#allocation11 + $0x3] sm:$0x1]
    %v834 = vadd.f32 %v823, %v825
    %v835 = vadd.f32 %v834, %v828
    %v836 = vadd.f32 %v835, %v830
    %v837 = vrot.slane %v836, 4
    %v838 = vadd.f32 %v836, %v837
    %v839 = vrot.slane %v838, 2
    %v840 = vadd.f32 %v838, %v839
    %v841 = vrot.slane %v840, 1
    %v842 = vadd.f32 %v840, %v841
    %v843 = vmul.f32 %v823, %v823
    %v844 = vmul.f32 %v825, %v825
    %v845 = vmul.f32 %v828, %v828
    %v846 = vmul.f32 %v830, %v830
    %v847 = vadd.f32 %v843, %v844
    %v848 = vadd.f32 %v847, %v845
    %v849 = vadd.f32 %v848, %v846
    %v850 = vrot.slane %v849, 4
    %v851 = vadd.f32 %v849, %v850
    %v852 = vrot.slane %v851, 2
    %v853 = vadd.f32 %v851, %v852
    %v854 = vrot.slane %v853, 1
    %v855 = vadd.f32 %v853, %v854
    %v856 = vsel %vm377, %v842, %v855
    %v857 = vld [vmem:[#allocation9] sm:$0xff]
    %v858 = vld [vmem:[#allocation9 + $0x8] sm:$0xff]
    %v859 = vld [vmem:[#allocation9 + $0x10] sm:$0xff]
    %v860 = vld [vmem:[#allocation9 + $0x18] sm:$0xff]
    %v861 = vld [vmem:[#allocation9 + $0x20] sm:$0xff]
    %v862 = vld [vmem:[#allocation9 + $0x28] sm:$0xff]
    %v863 = vld [vmem:[#allocation9 + $0x30] sm:$0xff]
    %v864 = vld [vmem:[#allocation9 + $0x38] sm:$0xff]
    %v865 = vld [vmem:[#allocation9 + $0x40] sm:$0xff]
    %v866 = vld [vmem:[#allocation9 + $0x48] sm:$0xff]
    %v867 = vld [vmem:[#allocation9 + $0x50] sm:$0xff]
    %v868 = vld [vmem:[#allocation9 + $0x58] sm:$0xff]
    %v869 = vld [vmem:[#allocation9 + $0x60] sm:$0xff]
    %v870 = vld [vmem:[#allocation9 + $0x68] sm:$0xff]
    %v871 = vld [vmem:[#allocation9 + $0x70] sm:$0xff]
    %v872 = vld [vmem:[#allocation9 + $0x78] sm:$0xff]
    %873 = vmatpush.msra.mxu0 %v872
    %874 = vmatpush.msra.mxu0 %v871
    %875 = vmatpush.msra.mxu0 %v870
    %876 = vmatpush.msra.mxu0 %v869
    %877 = vmatpush.msra.mxu0 %v868
    %878 = vmatpush.msra.mxu0 %v867
    %879 = vmatpush.msra.mxu0 %v866
    %880 = vmatpush.msra.mxu0 %v865
    %881 = vmatpush.msra.mxu0 %v864
    %882 = vmatpush.msra.mxu0 %v863
    %883 = vmatpush.msra.mxu0 %v862
    %884 = vmatpush.msra.mxu0 %v861
    %885 = vmatpush.msra.mxu0 %v860
    %886 = vmatpush.msra.mxu0 %v859
    %887 = vmatpush.msra.mxu0 %v858
    %888 = vmatpush.msra.mxu0 %v857
    %889 = vmatmul.f32.gmra.mxu0 %v856
    %v890 = vpop.f32.mrf.mxu0
    %v891 = vadd.f32 0.0, %v890
    %892 = vdwg.mxu0
    %v893 = vmul.f32 %v891, 0.001953125
    %v894 = vmul.f32 %v893, %v893
    %v896 = vrot.slane %v894, 7
    %v898 = vsub.f32 %v893, %v896
    %v899 = vmax.f32 %v898, 0.0
    %v900 = vperm.slane %v893, 0
    %v901 = vsub.f32 %v823, %v900
    %v902 = vsub.f32 %v825, %v900
    %v903 = vsub.f32 %v828, %v900
    %v904 = vsub.f32 %v830, %v900
    %v905 = vadd.f32 %v899, 1e-05
    %v906 = vrsqrt.pop %v905
    %v907 = vmul.f32 %v906, %v905
    %v908 = vmul.f32 %v907, %v906
    %v909 = vmul.f32 0.5, %v908
    %v910 = vsub.f32 1.5, %v909
    %v911 = vmul.f32 %v906, %v910
    %vm912 = vweird.f32 %v905
    %vm913 = vweird.f32 %v906
    %vm914 = vmor %vm912, %vm913
    %v915 = vsel %vm914, %v906, %v911
    %v916 = vperm.slane %v915, 1
    %v917 = vmul.f32 %v901, %v916
    %v918 = vmul.f32 %v902, %v916
    %v919 = vmul.f32 %v903, %v916
    %v920 = vmul.f32 %v904, %v916
    %v921 = vperm.slane %v832, 0
    %v922 = vmul.f32 %v917, %v921
    %v923 = vmul.f32 %v918, %v921
    %v924 = vmul.f32 %v919, %v921
    %v925 = vmul.f32 %v920, %v921
    %v926 = vperm.slane %v833, 0
    %v927 = vadd.f32 %v922, %v926
    %v928 = vadd.f32 %v923, %v926
    %v929 = vadd.f32 %v924, %v926
    %v930 = vadd.f32 %v925, %v926
    %v931 = vadd.f32 %v927, %v349
    %v932 = vadd.f32 %v928, %v350
    %v933 = vadd.f32 %v929, %v351
    %v934 = vadd.f32 %v930, %v352
    %v935 = vmax.f32 %v931, 0.0
    %v936 = vmax.f32 %v932, 0.0
    %v937 = vmax.f32 %v933, 0.0
    %v938 = vmax.f32 %v934, 0.0
    %939 = vst [vmem:[#allocation12] sm:$0xff] %v935
    %940 = vst [vmem:[#allocation12 + $0x8] sm:$0xff] %v936
    %941 = vst [vmem:[#allocation12 + $0x10] sm:$0xff] %v937
    %942 = vst [vmem:[#allocation12 + $0x18] sm:$0xff] %v938
    // Predicated region
    $region42: #{tpu_custom_call.1} parent=1 // pred_check
      _
    $region43: #{tpu_custom_call.1} parent=1 // pred_check_branch
      %944 = sbr.rel (0) target = $region45
    $region44: #{tpu_custom_call.1} parent=1 // pred_region
      %946 = vsyncadd [#allocation5], 0
      %s947 = sshll.u32 [#allocation12], 4
      %s948 = int_to_ptr.vmem [resolvable:$true] %s947
      %s949 = sshll.u32 %s5, 4
      %s950 = int_to_ptr.hbm [resolvable:$true] %s949
      %955 = dma.vmem_to_hbm [thread:$0]  %s948, 512, %s950, [#allocation5], 128, 128, 8
    $region45: #{tpu_custom_call.1} parent=1 // pred_fallthru
      _
    // Predicated region
    $region46: #{tpu_custom_call.1} parent=1 // pred_check
      _
    $region47: #{tpu_custom_call.1} parent=1 // pred_check_branch
      %957 = sbr.rel (0) target = $region49
    $region48: #{tpu_custom_call.1} parent=1 // pred_region
      %959 = dma.done [#allocation5], 512
    $region49: #{tpu_custom_call.1} parent=1 // pred_fallthru
      _
    %960 = vsyncpa [#allocation4], 1
    %961 = vsyncpa [#allocation7], 1
    %962 = vsyncpa [#allocation10], 1
    %963 = vsyncpa [#allocation5], 1

</llo_original>
